<compile_context>
chip_gen: v7x
topology: tpu7x:2x2x1
jax: 0.10.0
libtpu: 0.0.40
codegen_flags: <defaults>
</compile_context>

<pallas_src>
import functools

import jax
import jax.numpy as jnp
from jax import lax
from jax.experimental import pallas as pl
from jax.experimental.pallas import tpu as pltpu


def _round_up(v, m):
    return (v + m - 1) // m * m


def am_softmax_kernel(x_ref, w_ref, rxs_ref, rw_ref, label_ref,
                      logits_ref, loss_ref,
                      m_ref, l_ref, t_ref,
                      *, scaled_margin, n_classes, block_c,
                      needs_class_mask, dot_precision):
    j = pl.program_id(1)

    # Per-batch-tile init (first class tile only).
    @pl.when(j == 0)
    def _():
        m_ref[...] = jnp.full_like(m_ref, -jnp.inf)
        l_ref[...] = jnp.zeros_like(l_ref)
        t_ref[...] = jnp.zeros_like(t_ref)

    # Raw matmul on (bf16 by default) operands with f32 accumulation on the MXU;
    # normalization and the `s` scale are applied afterwards via the hoisted
    # rxs ([TB,1] = s/||x_row||) and rw ([1,TC] = 1/||W_col||) vectors.
    acc = jnp.dot(x_ref[...], w_ref[...],
                  preferred_element_type=jnp.float32,
                  precision=dot_precision)                    # [TB, TC] f32
    z = acc * rxs_ref[...] * rw_ref[...]                      # = s * cos(theta)

    tb, tc = z.shape
    col = j * block_c + lax.broadcasted_iota(jnp.int32, (tb, tc), 1)
    label_mask = col == label_ref[...]                        # margin "scatter"

    logits = jnp.where(label_mask, z - scaled_margin, z)
    logits_ref[...] = logits.astype(logits_ref.dtype)

    if needs_class_mask:
        # Padded class columns (only on the last class tile) are excluded from
        # the logsumexp.  This branch is statically removed when C_pad == C.
        lse_logits = jnp.where(col < n_classes, logits, -jnp.inf)
    else:
        lse_logits = logits

    # Online logsumexp over the class axis.
    tile_max = jnp.max(lse_logits, axis=1, keepdims=True)
    m_new = jnp.maximum(m_ref[...], tile_max)
    alpha = jnp.exp(m_ref[...] - m_new)
    p = jnp.exp(lse_logits - m_new)                           # exp(-inf) = 0
    l_ref[...] = alpha * l_ref[...] + jnp.sum(p, axis=1, keepdims=True)
    t_ref[...] = t_ref[...] + jnp.sum(jnp.where(label_mask, logits, 0.0),
                                      axis=1, keepdims=True)
    m_ref[...] = m_new

    # Finalize: per-row cross-entropy loss  lse(logits) - logits[label].
    @pl.when(j == pl.num_programs(1) - 1)
    def _():
        loss_ref[...] = m_ref[...] + jnp.log(l_ref[...]) - t_ref[...]


def _pick_tb(B, block_b):
    tb = min(block_b, _round_up(B, 8))
    # Prefer >= 2 batch tiles (v7x megacore shards the "parallel" batch axis)
    # as long as each tile still has >= 128 rows for MXU fill.
    if tb > 128 and _round_up(B, tb) == tb:
        tb = max(128, _round_up((B + 1) // 2, 8))
    return tb


def am_softmax_forward(x, W, label, *, margin=0.2, scale=30.0,
                       block_b=256, block_c=1024,
                       matmul_dtype=jnp.bfloat16,
                       matmul_precision=None,
                       logits_dtype=jnp.float32):
    """x: [B, nOut], W: [nOut, nClasses], label: [B] int -> (loss, logits)."""
    B, D = x.shape
    D2, C = W.shape
    assert D == D2
    assert label.shape[0] == B

    TB = _pick_tb(B, block_b)
    TC = min(block_c, _round_up(C, 128))
    B_pad = _round_up(B, TB)
    C_pad = _round_up(C, TC)
    needs_class_mask = C_pad != C

    x32 = x.astype(jnp.float32)
    w32 = W.astype(jnp.float32)

    # Hoisted norms (computed once, in f32, from the unquantized operands):
    #   rxs = scale / max(||x_row||, 1e-12)   [B, 1]
    #   rw  =   1   / max(||W_col||, 1e-12)   [1, C]
    rxs = scale * lax.rsqrt(jnp.maximum(
        jnp.sum(x32 * x32, axis=1, keepdims=True), 1e-24))
    rw = lax.rsqrt(jnp.maximum(
        jnp.sum(w32 * w32, axis=0, keepdims=True), 1e-24))

    x_p = jnp.pad(x32, ((0, B_pad - B), (0, 0))).astype(matmul_dtype)
    w_p = jnp.pad(w32, ((0, 0), (0, C_pad - C))).astype(matmul_dtype)
    rxs_p = jnp.pad(rxs, ((0, B_pad - B), (0, 0)))
    rw_p = jnp.pad(rw, ((0, 0), (0, C_pad - C)))
    lbl_p = jnp.pad(label.astype(jnp.int32).reshape(B, 1),
                    ((0, B_pad - B), (0, 0)))

    grid = (B_pad // TB, C_pad // TC)

    kernel = functools.partial(
        am_softmax_kernel,
        scaled_margin=float(scale) * float(margin),
        n_classes=C, block_c=TC,
        needs_class_mask=needs_class_mask,
        dot_precision=matmul_precision,
    )

    # VMEM budget from the actual (double-buffered) tile footprint + headroom,
    # clamped to [32 MiB default, 64 MiB = v7x physical per-core VMEM].
    mm_bytes = jnp.dtype(matmul_dtype).itemsize
    lg_bytes = jnp.dtype(logits_dtype).itemsize
    footprint = (2 * TB * D * mm_bytes          # x tile (resident over j)
                 + 2 * D * TC * mm_bytes        # W tile (streamed)
                 + 2 * TB * TC * lg_bytes       # logits tile (streamed out)
                 + 2 * (TC + 3 * TB) * 4        # rw / rxs / labels / loss
                 + 3 * TB * 4)                  # m / l / t scratch
    vmem_limit = int(min(64 * 1024 * 1024,
                         max(32 * 1024 * 1024, footprint + 16 * 1024 * 1024)))

    logits_p, loss_rows = pl.pallas_call(
        kernel,
        out_shape=(
            jax.ShapeDtypeStruct((B_pad, C_pad), logits_dtype),
            jax.ShapeDtypeStruct((B_pad, 1), jnp.float32),
        ),
        grid_spec=pltpu.PrefetchScalarGridSpec(
            num_scalar_prefetch=0,
            grid=grid,
            in_specs=[
                pl.BlockSpec((TB, D), lambda i, j: (i, 0)),   # x (resident over j)
                pl.BlockSpec((D, TC), lambda i, j: (0, j)),   # W streamed over classes
                pl.BlockSpec((TB, 1), lambda i, j: (i, 0)),   # s / ||x_row||
                pl.BlockSpec((1, TC), lambda i, j: (0, j)),   # 1 / ||W_col||
                pl.BlockSpec((TB, 1), lambda i, j: (i, 0)),   # labels
            ],
            out_specs=[
                pl.BlockSpec((TB, TC), lambda i, j: (i, j)),  # logits (lane-dense)
                pl.BlockSpec((TB, 1), lambda i, j: (i, 0)),   # per-row loss
            ],
            scratch_shapes=[pltpu.VMEM((TB, 1), jnp.float32)] * 3,  # m, l, t
        ),
        compiler_params=pltpu.CompilerParams(
            dimension_semantics=("parallel", "arbitrary"),
            vmem_limit_bytes=vmem_limit,
        ),
    )(x_p, w_p, rxs_p, rw_p, lbl_p)

    logits = logits_p[:B, :C]
    loss = jnp.sum(loss_rows[:B, 0]) / B        # mean reduction in the wrapper
    return loss, logits


if __name__ == "__main__":
    margin, scale = 0.2, 30.0
    configs = [
        (8, 32, 128),   # aligned shapes (no class padding)
        (6, 48, 200),   # exercises batch padding and the static class mask
    ]

    key = jax.random.PRNGKey(0)
    for (B, nOut, nClasses) in configs:
        key, kx, kw, kl = jax.random.split(key, 4)
        x = jax.random.normal(kx, (B, nOut), dtype=jnp.float32)
        # Deterministic xavier_normal_ init (gain=1): std = sqrt(2/(fan_in+fan_out)).
        std = (2.0 / (nOut + nClasses)) ** 0.5
        W = jax.random.normal(kw, (nOut, nClasses), dtype=jnp.float32) * std
        label = jax.random.randint(kl, (B,), 0, nClasses, dtype=jnp.int32)

        # Pure-JAX reference (normalize-first, exactly the PyTorch module math).
        x_n = x / jnp.maximum(jnp.linalg.norm(x, axis=1, keepdims=True), 1e-12)
        w_n = W / jnp.maximum(jnp.linalg.norm(W, axis=0, keepdims=True), 1e-12)
        costh = jnp.dot(x_n, w_n, precision=lax.Precision.HIGHEST)
        onehot = jax.nn.one_hot(label, nClasses, dtype=jnp.float32)
        ref_logits = scale * (costh - margin * onehot)
        ref_loss = jnp.mean(
            jax.nn.logsumexp(ref_logits, axis=1)
            - jnp.sum(ref_logits * onehot, axis=1))

        # Default fast path: bf16 matmul operands, f32 accumulation (tolerance
        # widened to accommodate bf16 operand rounding; accumulators stay f32).
        loss, logits = am_softmax_forward(x, W, label, margin=margin, scale=scale)
        jax.block_until_ready((loss, logits))
        assert jnp.allclose(logits, ref_logits, atol=5e-2, rtol=5e-2), (B, nOut, nClasses)
        assert jnp.allclose(loss, ref_loss, atol=5e-2, rtol=5e-2), (B, nOut, nClasses)

        # Exact-math validation path (f32 operands, HIGHEST precision).
        loss_hi, logits_hi = am_softmax_forward(
            x, W, label, margin=margin, scale=scale,
            matmul_dtype=jnp.float32, matmul_precision=lax.Precision.HIGHEST)
        jax.block_until_ready((loss_hi, logits_hi))
        assert jnp.allclose(logits_hi, ref_logits, atol=2e-3, rtol=2e-3), (B, nOut, nClasses)
        assert jnp.allclose(loss_hi, ref_loss, atol=2e-3, rtol=2e-3), (B, nOut, nClasses)

    print("KERNEL_OK")
</pallas_src>

<mosaic_0001>
module attributes {stable_mosaic.version = 11 : i64} {
  func.func @am_softmax_kernel(%arg0: i32, %arg1: i32, %arg2: memref<8x32xbf16, #tpu.memory_space<vmem>>, %arg3: memref<32x128xbf16, #tpu.memory_space<vmem>>, %arg4: memref<8x1xf32, #tpu.memory_space<vmem>>, %arg5: memref<1x128xf32, #tpu.memory_space<vmem>>, %arg6: memref<8x1xi32, #tpu.memory_space<vmem>>, %arg7: memref<8x128xf32, #tpu.memory_space<vmem>>, %arg8: memref<8x1xf32, #tpu.memory_space<vmem>>, %arg9: memref<8x1xf32, #tpu.memory_space<vmem>>, %arg10: memref<8x1xf32, #tpu.memory_space<vmem>>, %arg11: memref<8x1xf32, #tpu.memory_space<vmem>>) attributes {dimension_semantics = [#tpu.dimension_semantics<parallel>, #tpu.dimension_semantics<arbitrary>], iteration_bounds = array<i64: 1, 1>, scalar_prefetch = 0 : i64, scratch_operands = 3 : i64, tpu.core_type = #tpu.core_type<tc>, window_params = [{transform_indices = @transform_0, window_bounds = array<i64: 8, 32>}, {transform_indices = @transform_1, window_bounds = array<i64: 32, 128>}, {transform_indices = @transform_2, window_bounds = array<i64: 8, 1>}, {transform_indices = @transform_3, window_bounds = array<i64: 1, 128>}, {transform_indices = @transform_4, window_bounds = array<i64: 8, 1>}, {transform_indices = @transform_5, window_bounds = array<i64: 8, 128>}, {transform_indices = @transform_6, window_bounds = array<i64: 8, 1>}]} {
    %c0_i32 = arith.constant 0 : i32
    %0 = arith.cmpi eq, %arg1, %c0_i32 : i32
    %1 = arith.extui %0 : i1 to i32
    %c0_i32_0 = arith.constant 0 : i32
    %2 = arith.cmpi ne, %1, %c0_i32_0 : i32
    scf.if %2 {
      %cst_33 = arith.constant 0xFF800000 : f32
      %50 = vector.broadcast %cst_33 : f32 to vector<8x1xf32>
      %c0_34 = arith.constant 0 : index
      %c0_35 = arith.constant 0 : index
      %51 = vector.load %arg9[%c0_34, %c0_35] : memref<8x1xf32, #tpu.memory_space<vmem>>, vector<8x1xf32>
      tpu.vector_store %arg9[%c0_34, %c0_35], %50 {strides = array<i32>} : memref<8x1xf32, #tpu.memory_space<vmem>>, vector<8x1xf32>,
      %cst_36 = arith.constant 0.000000e+00 : f32
      %52 = vector.broadcast %cst_36 : f32 to vector<8x1xf32>
      %c0_37 = arith.constant 0 : index
      %c0_38 = arith.constant 0 : index
      %53 = vector.load %arg10[%c0_37, %c0_38] : memref<8x1xf32, #tpu.memory_space<vmem>>, vector<8x1xf32>
      tpu.vector_store %arg10[%c0_37, %c0_38], %52 {strides = array<i32>} : memref<8x1xf32, #tpu.memory_space<vmem>>, vector<8x1xf32>,
      %cst_39 = arith.constant 0.000000e+00 : f32
      %54 = vector.broadcast %cst_39 : f32 to vector<8x1xf32>
      %c0_40 = arith.constant 0 : index
      %c0_41 = arith.constant 0 : index
      %55 = vector.load %arg11[%c0_40, %c0_41] : memref<8x1xf32, #tpu.memory_space<vmem>>, vector<8x1xf32>
      tpu.vector_store %arg11[%c0_40, %c0_41], %54 {strides = array<i32>} : memref<8x1xf32, #tpu.memory_space<vmem>>, vector<8x1xf32>,
    } else {
    }
    %c0 = arith.constant 0 : index
    %c0_1 = arith.constant 0 : index
    %3 = vector.load %arg2[%c0, %c0_1] : memref<8x32xbf16, #tpu.memory_space<vmem>>, vector<8x32xbf16>
    %c0_2 = arith.constant 0 : index
    %c0_3 = arith.constant 0 : index
    %4 = vector.load %arg3[%c0_2, %c0_3] : memref<32x128xbf16, #tpu.memory_space<vmem>>, vector<32x128xbf16>
    %cst = arith.constant dense<0.000000e+00> : vector<8x128xf32>
    %5 = tpu.matmul %3, %4, %cst {dimension_numbers = #tpu.dot_dimension_numbers<[1], [0], [0], [1], [0, 0, 1, 1], [], []>} : vector<8x32xbf16>, vector<32x128xbf16>, vector<8x128xf32> -> vector<8x128xf32>
    %c0_4 = arith.constant 0 : index
    %c0_5 = arith.constant 0 : index
    %6 = vector.load %arg4[%c0_4, %c0_5] : memref<8x1xf32, #tpu.memory_space<vmem>>, vector<8x1xf32>
    %7 = vector.broadcast %6 : vector<8x1xf32> to vector<8x128xf32>
    %8 = arith.mulf %5, %7 : vector<8x128xf32>
    %c0_6 = arith.constant 0 : index
    %c0_7 = arith.constant 0 : index
    %9 = vector.load %arg5[%c0_6, %c0_7] : memref<1x128xf32, #tpu.memory_space<vmem>>, vector<1x128xf32>
    %10 = vector.broadcast %9 : vector<1x128xf32> to vector<8x128xf32>
    %11 = arith.mulf %8, %10 : vector<8x128xf32>
    %c128_i32 = arith.constant 128 : i32
    %12 = arith.muli %arg1, %c128_i32 : i32
    %13 = tpu.iota {dimensions = array<i32: 1>} : vector<8x128xi32>
    %14 = vector.broadcast %12 : i32 to vector<8x128xi32>
    %15 = arith.addi %14, %13 : vector<8x128xi32>
    %c0_8 = arith.constant 0 : index
    %c0_9 = arith.constant 0 : index
    %16 = vector.load %arg6[%c0_8, %c0_9] : memref<8x1xi32, #tpu.memory_space<vmem>>, vector<8x1xi32>
    %17 = vector.broadcast %16 : vector<8x1xi32> to vector<8x128xi32>
    %18 = arith.cmpi eq, %15, %17 : vector<8x128xi32>
    %cst_10 = arith.constant 6.000000e+00 : f32
    %19 = vector.broadcast %cst_10 : f32 to vector<8x128xf32>
    %20 = arith.subf %11, %19 : vector<8x128xf32>
    %21 = arith.select %18, %20, %11 : vector<8x128xi1>, vector<8x128xf32>
    %c0_11 = arith.constant 0 : index
    %c0_12 = arith.constant 0 : index
    %22 = vector.load %arg7[%c0_11, %c0_12] : memref<8x128xf32, #tpu.memory_space<vmem>>, vector<8x128xf32>
    tpu.vector_store %arg7[%c0_11, %c0_12], %21 {strides = array<i32>} : memref<8x128xf32, #tpu.memory_space<vmem>>, vector<8x128xf32>,
    %cst_13 = arith.constant dense<0xFF800000> : vector<8xf32>
    %23 = vector.multi_reduction <maximumf>, %21, %cst_13 [1] : vector<8x128xf32> to vector<8xf32>
    %24 = vector.shape_cast %23 : vector<8xf32> to vector<8x1xf32>
    %c0_14 = arith.constant 0 : index
    %c0_15 = arith.constant 0 : index
    %25 = vector.load %arg9[%c0_14, %c0_15] : memref<8x1xf32, #tpu.memory_space<vmem>>, vector<8x1xf32>
    %26 = arith.maximumf %25, %24 : vector<8x1xf32>
    %c0_16 = arith.constant 0 : index
    %c0_17 = arith.constant 0 : index
    %27 = vector.load %arg9[%c0_16, %c0_17] : memref<8x1xf32, #tpu.memory_space<vmem>>, vector<8x1xf32>
    %28 = arith.subf %27, %26 : vector<8x1xf32>
    %29 = math.exp %28 : vector<8x1xf32>
    %30 = vector.broadcast %26 : vector<8x1xf32> to vector<8x128xf32>
    %31 = arith.subf %21, %30 : vector<8x128xf32>
    %32 = math.exp %31 : vector<8x128xf32>
    %c0_18 = arith.constant 0 : index
    %c0_19 = arith.constant 0 : index
    %33 = vector.load %arg10[%c0_18, %c0_19] : memref<8x1xf32, #tpu.memory_space<vmem>>, vector<8x1xf32>
    %34 = arith.mulf %29, %33 : vector<8x1xf32>
    %cst_20 = arith.constant dense<0.000000e+00> : vector<8xf32>
    %35 = vector.multi_reduction <add>, %32, %cst_20 [1] : vector<8x128xf32> to vector<8xf32>
    %36 = vector.shape_cast %35 : vector<8xf32> to vector<8x1xf32>
    %37 = arith.addf %34, %36 : vector<8x1xf32>
    %c0_21 = arith.constant 0 : index
    %c0_22 = arith.constant 0 : index
    %38 = vector.load %arg10[%c0_21, %c0_22] : memref<8x1xf32, #tpu.memory_space<vmem>>, vector<8x1xf32>
    tpu.vector_store %arg10[%c0_21, %c0_22], %37 {strides = array<i32>} : memref<8x1xf32, #tpu.memory_space<vmem>>, vector<8x1xf32>,
    %c0_23 = arith.constant 0 : index
    %c0_24 = arith.constant 0 : index
    %39 = vector.load %arg11[%c0_23, %c0_24] : memref<8x1xf32, #tpu.memory_space<vmem>>, vector<8x1xf32>
    %cst_25 = arith.constant 0.000000e+00 : f32
    %40 = vector.broadcast %cst_25 : f32 to vector<8x128xf32>
    %41 = arith.select %18, %21, %40 : vector<8x128xi1>, vector<8x128xf32>
    %cst_26 = arith.constant dense<0.000000e+00> : vector<8xf32>
    %42 = vector.multi_reduction <add>, %41, %cst_26 [1] : vector<8x128xf32> to vector<8xf32>
    %43 = vector.shape_cast %42 : vector<8xf32> to vector<8x1xf32>
    %44 = arith.addf %39, %43 : vector<8x1xf32>
    %c0_27 = arith.constant 0 : index
    %c0_28 = arith.constant 0 : index
    %45 = vector.load %arg11[%c0_27, %c0_28] : memref<8x1xf32, #tpu.memory_space<vmem>>, vector<8x1xf32>
    tpu.vector_store %arg11[%c0_27, %c0_28], %44 {strides = array<i32>} : memref<8x1xf32, #tpu.memory_space<vmem>>, vector<8x1xf32>,
    %c0_29 = arith.constant 0 : index
    %c0_30 = arith.constant 0 : index
    %46 = vector.load %arg9[%c0_29, %c0_30] : memref<8x1xf32, #tpu.memory_space<vmem>>, vector<8x1xf32>
    tpu.vector_store %arg9[%c0_29, %c0_30], %26 {strides = array<i32>} : memref<8x1xf32, #tpu.memory_space<vmem>>, vector<8x1xf32>,
    %c0_i32_31 = arith.constant 0 : i32
    %47 = arith.cmpi eq, %arg1, %c0_i32_31 : i32
    %48 = arith.extui %47 : i1 to i32
    %c0_i32_32 = arith.constant 0 : i32
    %49 = arith.cmpi ne, %48, %c0_i32_32 : i32
    scf.if %49 {
      %c0_33 = arith.constant 0 : index
      %c0_34 = arith.constant 0 : index
      %50 = vector.load %arg9[%c0_33, %c0_34] : memref<8x1xf32, #tpu.memory_space<vmem>>, vector<8x1xf32>
      %c0_35 = arith.constant 0 : index
      %c0_36 = arith.constant 0 : index
      %51 = vector.load %arg10[%c0_35, %c0_36] : memref<8x1xf32, #tpu.memory_space<vmem>>, vector<8x1xf32>
      %52 = math.log %51 : vector<8x1xf32>
      %53 = arith.addf %50, %52 : vector<8x1xf32>
      %c0_37 = arith.constant 0 : index
      %c0_38 = arith.constant 0 : index
      %54 = vector.load %arg11[%c0_37, %c0_38] : memref<8x1xf32, #tpu.memory_space<vmem>>, vector<8x1xf32>
      %55 = arith.subf %53, %54 : vector<8x1xf32>
      %c0_39 = arith.constant 0 : index
      %c0_40 = arith.constant 0 : index
      %56 = vector.load %arg8[%c0_39, %c0_40] : memref<8x1xf32, #tpu.memory_space<vmem>>, vector<8x1xf32>
      tpu.vector_store %arg8[%c0_39, %c0_40], %55 {strides = array<i32>} : memref<8x1xf32, #tpu.memory_space<vmem>>, vector<8x1xf32>,
    } else {
    }
    return
  }
  func.func @transform_0(%arg0: i32, %arg1: i32) -> (i32, i32) {
    %c0_i32 = arith.constant 0 : i32
    %c0_i32_0 = arith.constant 0 : i32
    return %arg0, %c0_i32 : i32, i32
  }
  func.func @transform_1(%arg0: i32, %arg1: i32) -> (i32, i32) {
    %c0_i32 = arith.constant 0 : i32
    %c0_i32_0 = arith.constant 0 : i32
    return %c0_i32, %arg1 : i32, i32
  }
  func.func @transform_2(%arg0: i32, %arg1: i32) -> (i32, i32) {
    %c0_i32 = arith.constant 0 : i32
    %c0_i32_0 = arith.constant 0 : i32
    return %arg0, %c0_i32 : i32, i32
  }
  func.func @transform_3(%arg0: i32, %arg1: i32) -> (i32, i32) {
    %c0_i32 = arith.constant 0 : i32
    %c0_i32_0 = arith.constant 0 : i32
    return %c0_i32, %arg1 : i32, i32
  }
  func.func @transform_4(%arg0: i32, %arg1: i32) -> (i32, i32) {
    %c0_i32 = arith.constant 0 : i32
    %c0_i32_0 = arith.constant 0 : i32
    return %arg0, %c0_i32 : i32, i32
  }
  func.func @transform_5(%arg0: i32, %arg1: i32) -> (i32, i32) {
    %c0_i32 = arith.constant 0 : i32
    return %arg0, %arg1 : i32, i32
  }
  func.func @transform_6(%arg0: i32, %arg1: i32) -> (i32, i32) {
    %c0_i32 = arith.constant 0 : i32
    %c0_i32_0 = arith.constant 0 : i32
    return %arg0, %c0_i32 : i32, i32
  }
}

</mosaic_0001>

<llo_original>
// kernel: tpu_custom_call.1
$region0: #{tpu_custom_call.1}
  #allocation0 [shape = 'u32[]', space=smem, size = 0x4, offset = 0x4, fixed_abs, tag = 'smem constant byte address 0x4 - core index']
  #allocation1 [shape = 'u32[144,128]{1,0:T(1,128)}', space=vmem, size = 0x12000, scoped, tag = 'internal scratch']
  #allocation2 [shape = 'f32[8,1]{1,0:T(8,128)}', space=vmem, size = 0x1000, scoped, tag = 'scratch operand']
  #allocation3 [shape = 'f32[8,1]{1,0:T(8,128)}', space=vmem, size = 0x1000, scoped, tag = 'scratch operand']
  #allocation4 [shape = 'f32[8,1]{1,0:T(8,128)}', space=vmem, size = 0x1000, scoped, tag = 'scratch operand']
  %s0 = inlined_call_operand.vmem [shape: bf16[8,32], index: 0, kind: input, shape index: {}]
  %s1 = inlined_call_operand.vmem [shape: bf16[32,128], index: 1, kind: input, shape index: {}]
  %s2 = inlined_call_operand.vmem [shape: f32[8,1], index: 2, kind: input, shape index: {}]
  %s3 = inlined_call_operand.vmem [shape: f32[1,128], index: 3, kind: input, shape index: {}]
  %s4 = inlined_call_operand.vmem [shape: s32[8,1], index: 4, kind: input, shape index: {}]
  %s5 = inlined_call_operand.hbm [shape: f32[8,128], index: 5, kind: output, shape index: {0}]
  %s6 = inlined_call_operand.vmem [shape: f32[8,1], index: 6, kind: output, shape index: {1}]
  %7 = xla_tuple %s5, %s6
  %s8 = sld [smem:[#allocation0]]
  $region46: #{tpu_custom_call.1} parent=0
    _
  %s10 = ssub.s32 1, %s8
  %s11 = scalar_select 0, %s10, %s8
  $region1: #{tpu_custom_call.1} parent=0
    #allocation5 [shape = 'u8[4096]{0}', space=vmem, size = 0x1000, scoped, tag = 'output window, operand 0, single buffered']
    #allocation6 [shape = 's32[1]{0}', space=sflag, size = 0x4, scoped, tag = 'scoped memory for tpu_custom_call.1']
    %12 = vsyncpa [#allocation6], 0
    // Predicated region
    $region2: #{tpu_custom_call.1} parent=1 // pred_check
      _
    $region3: #{tpu_custom_call.1} parent=1 // pred_check_branch
      %14 = sbr.rel (0) target = $region5
    $region4: #{tpu_custom_call.1} parent=1 // pred_region
      _
    $region5: #{tpu_custom_call.1} parent=1 // pred_fallthru
      _
    // Predicated region
    $region6: #{tpu_custom_call.1} parent=1 // pred_check
      _
    $region7: #{tpu_custom_call.1} parent=1 // pred_check_branch
      %16 = sbr.rel (0) target = $region9
    $region8: #{tpu_custom_call.1} parent=1 // pred_region
      _
    $region9: #{tpu_custom_call.1} parent=1 // pred_fallthru
      _
    // Predicated region
    $region10: #{tpu_custom_call.1} parent=1 // pred_check
      _
    $region11: #{tpu_custom_call.1} parent=1 // pred_check_branch
      %18 = sbr.rel (0) target = $region13
    $region12: #{tpu_custom_call.1} parent=1 // pred_region
      _
    $region13: #{tpu_custom_call.1} parent=1 // pred_fallthru
      _
    // Predicated region
    $region14: #{tpu_custom_call.1} parent=1 // pred_check
      _
    $region15: #{tpu_custom_call.1} parent=1 // pred_check_branch
      %20 = sbr.rel (0) target = $region17
    $region16: #{tpu_custom_call.1} parent=1 // pred_region
      _
    $region17: #{tpu_custom_call.1} parent=1 // pred_fallthru
      _
    // Predicated region
    $region18: #{tpu_custom_call.1} parent=1 // pred_check
      _
    $region19: #{tpu_custom_call.1} parent=1 // pred_check_branch
      %22 = sbr.rel (0) target = $region21
    $region20: #{tpu_custom_call.1} parent=1 // pred_region
      _
    $region21: #{tpu_custom_call.1} parent=1 // pred_fallthru
      _
    %p24 = scmp.eq.s32.totalorder 0, 0
    // Predicated region
    $region22: #{tpu_custom_call.1} parent=1 // pred_check
      %p25 = pneg %p24
    $region23: #{tpu_custom_call.1} parent=1 // pred_check_branch
      %27 = sbr.rel (%p25) target = $region25
    $region24: #{tpu_custom_call.1} parent=1 // pred_region
      %vm28 = vcmask 7168
      %29 = vst.msk [vmem:[#allocation2] sm:$0xff] %vm28, -inf
      %30 = vst.msk [vmem:[#allocation3] sm:$0xff] %vm28, 0.0
      %31 = vst.msk [vmem:[#allocation4] sm:$0xff] %vm28, 0.0
    $region25: #{tpu_custom_call.1} parent=1 // pred_fallthru
      _
    %v32 = vld [vmem:[%s0] sm:$0xf]
    %v33 = vld [vmem:[%s1] sm:$0xf]
    %v34 = vld [vmem:[%s1 + $0x4] sm:$0xf]
    %v35 = vld [vmem:[%s1 + $0x8] sm:$0xf]
    %v36 = vld [vmem:[%s1 + $0xc] sm:$0xf]
    %v41 = vunpack.c.l.b16 %v33
    %v42 = vunpack.c.l.b16 %v34
    %v43 = vunpack.c.l.b16 %v35
    %v44 = vunpack.c.l.b16 %v36
    %v45 = vpack.c.b16 %v42, %v41
    %v46 = vpack.c.b16 %v44, %v43
    %vm49 = vcmask 261120
    %v51 = vsel %vm49, %v32, 0
    %53 = vmatprep.subr.bf16.mxu0 0
    %54 = vmatpush1.bf16.msra.mxu0 %v45
    %55 = vmatprep.subr.bf16.mxu0 0
    %56 = vmatpush1.bf16.msra.mxu0 %v46
    %57 = vmatprep.subr.bf16.mxu0 0
    %58 = vmatpush1.bf16.msra.mxu0 0
    %59 = vmatprep.subr.bf16.mxu0 0
    %60 = vmatpush1.bf16.msra.mxu0 0
    %61 = vmatprep.subr.bf16.mxu0 0
    %62 = vmatpush1.bf16.msra.mxu0 0
    %63 = vmatprep.subr.bf16.mxu0 0
    %64 = vmatpush1.bf16.msra.mxu0 0
    %65 = vmatprep.subr.bf16.mxu0 0
    %66 = vmatpush1.bf16.msra.mxu0 0
    %67 = vmatprep.subr.bf16.mxu0 0
    %68 = vmatpush1.bf16.msra.mxu0 0
    %69 = vmatprep.subr.bf16.mxu0 0
    %70 = vmatpush1.bf16.msra.mxu0 0
    %71 = vmatprep.subr.bf16.mxu0 0
    %72 = vmatpush1.bf16.msra.mxu0 0
    %73 = vmatprep.subr.bf16.mxu0 0
    %74 = vmatpush1.bf16.msra.mxu0 0
    %75 = vmatprep.subr.bf16.mxu0 0
    %76 = vmatpush1.bf16.msra.mxu0 0
    %77 = vmatprep.subr.bf16.mxu0 0
    %78 = vmatpush1.bf16.msra.mxu0 0
    %79 = vmatprep.subr.bf16.mxu0 0
    %80 = vmatpush1.bf16.msra.mxu0 0
    %81 = vmatprep.subr.bf16.mxu0 0
    %82 = vmatpush1.bf16.msra.mxu0 0
    %83 = vmatprep.subr.bf16.mxu0 0
    %84 = vmatpush1.bf16.msra.mxu0 0
    %85 = vmatprep.mubr.bf16.mxu0 0
    %86 = vmatmul.mubr.bf16.gmra.mrb[0].mxu0 %v51
    %v87 = vpop.f32.mrb[0].mxu0
    %v88 = vadd.f32 0.0, %v87
    %v89 = vpop.f32.mrb[0].mxu0
    %v90 = vpop.f32.mrb[0].mxu0
    %v91 = vpop.f32.mrb[0].mxu0
    %92 = vdwg.mxu0
    %v93 = vld [vmem:[%s2] sm:$0xff]
    %95 = vset.pattern.permute.xlu0 0
    %96 = vperm.xlu0 %95, %v93
    %v97 = vpop.permute.xlu0 %96
    %v99 = vmul.f32 %v88, %v97
    %v100 = vld [vmem:[%s3] sm:$0x1]
    %v102 = vlaneseq
    %v103 = vshrl.u32 %v102, 7
    %v104 = vsub.s32 0, %v103
    %v105 = vrot.slane %v100, %v104
    %v107 = vmul.f32 %v99, %v105
    %s108 = smul.u32 0, 128
    %v109 = vlaneseq
    %v110 = vand.u32 %v109, 127
    %v111 = vstv %s108
    %v112 = vadd.s32 %v111, %v110
    %v113 = vld [vmem:[%s4] sm:$0xff]
    %114 = vset.pattern.permute.xlu0 0
    %115 = vperm.xlu0 %114, %v113
    %v116 = vpop.permute.xlu0 %115
    %vm117 = vcmp.eq.s32.totalorder %v112, %v116
    %v118 = vsub.f32 %v107, 6.0
    %v119 = vsel %vm117, %v118, %v107
    %120 = vst [vmem:[#allocation5] sm:$0xff] %v119
    %121 = vmax.xlane.f32.xlu0 %v119
    %v122 = vpop.xlane.xlu0 %121
    %v123 = vld [vmem:[#allocation2] sm:$0xff]
    %v124 = vmax.f32 %v123, %v122
    %v125 = vsub.f32 %v123, %v124
    %v126 = vmul.f32 %v125, 1.442695
    %v127 = vpow.pop %v126
    %129 = vset.pattern.permute.xlu0 0
    %130 = vperm.xlu0 %129, %v124
    %v131 = vpop.permute.xlu0 %130
    %v133 = vsub.f32 %v119, %v131
    %v134 = vmul.f32 %v133, 1.442695
    %v135 = vpow.pop %v134
    %v136 = vld [vmem:[#allocation3] sm:$0xff]
    %v137 = vmul.f32 %v127, %v136
    %138 = vadd.xlane.f32.xlu0 %v135
    %v139 = vpop.xlane.xlu0 %138
    %v140 = vadd.f32 %v137, %v139
    %vm141 = vcmask 7168
    %142 = vst.msk [vmem:[#allocation3] sm:$0xff] %vm141, %v140
    %v143 = vld [vmem:[#allocation4] sm:$0xff]
    %v144 = vsel %vm117, %v118, 0.0
    %145 = vadd.xlane.f32.xlu0 %v144
    %v146 = vpop.xlane.xlu0 %145
    %v147 = vadd.f32 %v143, %v146
    %148 = vst.msk [vmem:[#allocation4] sm:$0xff] %vm141, %v147
    %149 = vst.msk [vmem:[#allocation2] sm:$0xff] %vm141, %v124
    // Predicated region
    $region26: #{tpu_custom_call.1} parent=1 // pred_check
      %p150 = pneg %p24
    $region27: #{tpu_custom_call.1} parent=1 // pred_check_branch
      %152 = sbr.rel (%p150) target = $region29
    $region28: #{tpu_custom_call.1} parent=1 // pred_region
      %v153 = vld [vmem:[#allocation2] sm:$0xff]
      %v154 = vld [vmem:[#allocation3] sm:$0xff]
      %v155 = vlog2.pop %v154
      %v156 = vmul.f32 %v155, 0.6931472
      %v157 = vadd.f32 %v153, %v156
      %v158 = vld [vmem:[#allocation4] sm:$0xff]
      %v159 = vsub.f32 %v157, %v158
      %160 = vst.msk [vmem:[%s6] sm:$0xff] %vm141, %v159
    $region29: #{tpu_custom_call.1} parent=1 // pred_fallthru
      _
    // Predicated region
    $region30: #{tpu_custom_call.1} parent=1 // pred_check
      _
    $region31: #{tpu_custom_call.1} parent=1 // pred_check_branch
      %162 = sbr.rel (0) target = $region33
    $region32: #{tpu_custom_call.1} parent=1 // pred_region
      %s164 = ssub.s32 128, 128
      %165 = vsyncadd [#allocation6], %s164
      %s167 = sshll.u32 [#allocation5], 4
      %s168 = int_to_ptr.vmem [resolvable:$true] %s167
      %170 = dma.vmem_to_hbm [thread:$0]  %s168, 128, %s5, [#allocation6]
    $region33: #{tpu_custom_call.1} parent=1 // pred_fallthru
      _
    // Predicated region
    $region34: #{tpu_custom_call.1} parent=1 // pred_check
      _
    $region35: #{tpu_custom_call.1} parent=1 // pred_check_branch
      %172 = sbr.rel (0) target = $region37
    $region36: #{tpu_custom_call.1} parent=1 // pred_region
      _
    $region37: #{tpu_custom_call.1} parent=1 // pred_fallthru
      _
    // Predicated region
    $region38: #{tpu_custom_call.1} parent=1 // pred_check
      _
    $region39: #{tpu_custom_call.1} parent=1 // pred_check_branch
      %174 = sbr.rel (0) target = $region41
    $region40: #{tpu_custom_call.1} parent=1 // pred_region
      %175 = dma.done [#allocation6], 128
    $region41: #{tpu_custom_call.1} parent=1 // pred_fallthru
      _
    // Predicated region
    $region42: #{tpu_custom_call.1} parent=1 // pred_check
      _
    $region43: #{tpu_custom_call.1} parent=1 // pred_check_branch
      %177 = sbr.rel (0) target = $region45
    $region44: #{tpu_custom_call.1} parent=1 // pred_region
      _
    $region45: #{tpu_custom_call.1} parent=1 // pred_fallthru
      _
    %178 = vsyncpa [#allocation6], 1

</llo_original>
